<compile_context>
chip_gen: v5e
topology: v5e:2x2
jax: 0.10.0
libtpu: 0.0.40
codegen_flags: <defaults>
</compile_context>

<pallas_src>
import functools

import jax
import jax.numpy as jnp
from jax.experimental import pallas as pl
from jax.experimental.pallas import tpu as pltpu

LANE = 128
SUBLANE = 8


def _round_up(x, m):
    return (x + m - 1) // m * m


# ---------------- Pallas kernels ----------------

def _skip_kernel(x_ref, wn_ref, bn_ref, o_ref):
    # y = x + tanh(x @ Wn + bn)     (n_in == n_out)
    x = x_ref[...]
    h = jnp.dot(x, wn_ref[...], preferred_element_type=jnp.float32) + bn_ref[...]
    tn = o_ref.shape[1]
    if tn == x_ref.shape[1]:
        xs = x                                        # common (un-tiled N) case
    else:
        # N-tiled fallback: residual columns for this output-column block.
        j = pl.program_id(1)
        xs = x_ref[:, pl.ds(pl.multiple_of(j * tn, LANE), tn)]
    o_ref[...] = (xs.astype(jnp.float32) + jnp.tanh(h)).astype(o_ref.dtype)


def _proj_kernel(x_ref, wr_ref, wn_ref, br_ref, bn_ref, o_ref):
    # y = (x @ Wr + br) + tanh(x @ Wn + bn)
    x = x_ref[...]
    r = jnp.dot(x, wr_ref[...], preferred_element_type=jnp.float32) + br_ref[...]
    h = jnp.dot(x, wn_ref[...], preferred_element_type=jnp.float32) + bn_ref[...]
    o_ref[...] = (r + jnp.tanh(h)).astype(o_ref.dtype)


# ---------------- one-time parameter preparation ----------------

def prepare_mlp_res_params(params, *, skipper, dtype=jnp.float32):
    """One-time prep (do NOT call per forward): transpose PyTorch (n_out, n_in)
    weights to (n_in, n_out) and reshape biases to (1, n_out).  Pass
    dtype=jnp.bfloat16 (with bf16 activations) for the halved-HBM-traffic
    variant on v6e/v7x."""
    wn = jnp.asarray(params["wn"], dtype)             # (n_out, n_in)
    prepared = {"wn": wn.T, "bn": jnp.asarray(params["bn"], dtype).reshape(1, -1)}
    if skipper:
        assert wn.shape[0] == wn.shape[1], "skipper path requires n_in == n_out"
    else:
        prepared["wr"] = jnp.asarray(params["wr"], dtype).T
        prepared["br"] = jnp.asarray(params["br"], dtype).reshape(1, -1)
    return prepared


# ---------------- tiling / VMEM budgeting ----------------

@functools.lru_cache(maxsize=1)
def _vmem_limit_bytes():
    phys = None
    try:
        phys = int(getattr(pltpu.get_tpu_info(), "vmem_capacity_bytes", 0)) or None
    except Exception:
        phys = None
    if phys is None:
        return 48 * 1024 * 1024                        # safe on every generation
    # v5e/v6e (128 MiB physical) -> 64 MiB; v7x (64 MiB per TC) -> 48 MiB.
    return min(phys // 2 + 16 * 1024 * 1024, 64 * 1024 * 1024)


def _choose_tiling(B, n_in, n_out, itemsize, n_mats, vmem_limit):
    budget = vmem_limit - 4 * 1024 * 1024              # compiler-scratch headroom

    def resident_w_bytes(tn):
        # weights + biases; x2 because constant-index blocks still get the
        # default double-buffering.
        return 2 * n_mats * (n_in + 1) * tn * itemsize

    tile_n = n_out
    if resident_w_bytes(tile_n) > budget // 2 and n_out > LANE:
        # N-tiled fallback: weights use at most ~half the budget.
        max_tn = (budget // 2) // (2 * n_mats * (n_in + 1) * itemsize)
        tile_n = int(max(LANE, min(n_out, (max_tn // LANE) * LANE)))

    x_out_budget = max(budget - resident_w_bytes(tile_n), budget // 4)
    per_row = 2 * (n_in + tile_n) * itemsize            # double-buffered x + out
    tile_b = int(max(SUBLANE, (x_out_budget // per_row) // SUBLANE * SUBLANE))
    tile_b = min(tile_b, 2048)
    if B <= tile_b:
        if B >= 2 * SUBLANE:
            # >=2 batch steps so v7x's second TensorCore gets work.
            tile_b = min(tile_b, _round_up((B + 1) // 2, SUBLANE))
        else:
            tile_b = B                                   # full-dim block is legal
    return tile_b, tile_n


# ---------------- pallas_call wrapper ----------------

def _pallas_forward(x, weights, biases, kernel):
    B, n_in = x.shape
    n_out = weights[0].shape[1]
    itemsize = x.dtype.itemsize
    vmem_limit = _vmem_limit_bytes()
    tile_b, tile_n = _choose_tiling(B, n_in, n_out, itemsize, len(weights), vmem_limit)
    grid = (pl.cdiv(B, tile_b), pl.cdiv(n_out, tile_n))

    x_spec = pl.BlockSpec((tile_b, n_in), lambda i, j: (i, 0))
    w_spec = pl.BlockSpec((n_in, tile_n), lambda i, j: (0, j))
    b_spec = pl.BlockSpec((1, tile_n), lambda i, j: (0, j))
    out_spec = pl.BlockSpec((tile_b, tile_n), lambda i, j: (i, j))

    wb_bytes = (sum(w.size for w in weights) + sum(b.size for b in biases)) * itemsize
    cost = pl.CostEstimate(
        flops=2 * B * n_in * n_out * len(weights) + 2 * B * n_out,
        transcendentals=B * n_out,
        bytes_accessed=(x.size + B * n_out) * itemsize + wb_bytes,
    )

    return pl.pallas_call(
        kernel,
        out_shape=jax.ShapeDtypeStruct((B, n_out), x.dtype),
        grid=grid,
        in_specs=[x_spec] + [w_spec] * len(weights) + [b_spec] * len(biases),
        out_specs=out_spec,
        compiler_params=pltpu.CompilerParams(
            dimension_semantics=("parallel", "parallel"),
            vmem_limit_bytes=vmem_limit,
        ),
        cost_estimate=cost,
    )(x, *weights, *biases)


@jax.jit
def _skip_call(x, wn, bn):
    return _pallas_forward(x, [wn], [bn], _skip_kernel)


@jax.jit
def _proj_call(x, wr, wn, br, bn):
    return _pallas_forward(x, [wr, wn], [br, bn], _proj_kernel)


def mlp_res_block(x, prepared, *, skipper):
    """x: (B, n_in). prepared from prepare_mlp_res_params()."""
    if skipper:
        return _skip_call(x, prepared["wn"], prepared["bn"])
    return _proj_call(x, prepared["wr"], prepared["wn"], prepared["br"], prepared["bn"])


# ---------------- pure-JAX reference ----------------

def mlp_res_block_ref(x, params, *, skipper):
    h = jnp.tanh(x @ params["wn"].T + params["bn"])
    if skipper:
        return x + h
    return (x @ params["wr"].T + params["br"]) + h


def _init_linear(key, n_in, n_out):
    # matches nn.Linear's uniform(-1/sqrt(n_in), 1/sqrt(n_in)) init
    kw, kb = jax.random.split(key)
    bound = 1.0 / jnp.sqrt(jnp.float32(n_in))
    w = jax.random.uniform(kw, (n_out, n_in), jnp.float32, -bound, bound)
    b = jax.random.uniform(kb, (n_out,), jnp.float32, -bound, bound)
    return w, b


if __name__ == "__main__":
    key = jax.random.PRNGKey(0)
    k_x, k_x2, k_n, k_r = jax.random.split(key, 4)

    # --- case 1: skipper (n_in == n_out), B >= 16 exercises a 2-step grid ---
    B1, n_in = 32, 32
    x1 = jax.random.normal(k_x, (B1, n_in), jnp.float32)
    wn, bn = _init_linear(k_n, n_in, n_in)
    params_skip = {"wn": wn, "bn": bn}
    prep_s = prepare_mlp_res_params(params_skip, skipper=True)
    y_skip = jax.block_until_ready(mlp_res_block(x1, prep_s, skipper=True))
    y_skip_ref = mlp_res_block_ref(x1, params_skip, skipper=True)
    assert y_skip.shape == (B1, n_in)
    assert jnp.allclose(y_skip, y_skip_ref, atol=1e-5, rtol=1e-5)

    # --- case 2: projection residual (n_in != n_out, n_out not lane-aligned) ---
    B2, n_out = 8, 48
    x2 = jax.random.normal(k_x2, (B2, n_in), jnp.float32)
    wn2, bn2 = _init_linear(k_n, n_in, n_out)
    wr2, br2 = _init_linear(k_r, n_in, n_out)
    params_proj = {"wn": wn2, "bn": bn2, "wr": wr2, "br": br2}
    prep_p = prepare_mlp_res_params(params_proj, skipper=False)
    y_proj = jax.block_until_ready(mlp_res_block(x2, prep_p, skipper=False))
    y_proj_ref = mlp_res_block_ref(x2, params_proj, skipper=False)
    assert y_proj.shape == (B2, n_out)
    assert jnp.allclose(y_proj, y_proj_ref, atol=1e-5, rtol=1e-5)

    # --- case 3: bf16 I/O variant (halved HBM traffic on v6e/v7x) ---
    prep_b = prepare_mlp_res_params(params_proj, skipper=False, dtype=jnp.bfloat16)
    x2_bf = x2.astype(jnp.bfloat16)
    y_bf = jax.block_until_ready(mlp_res_block(x2_bf, prep_b, skipper=False))
    params_bf = {k: jnp.asarray(v, jnp.bfloat16).astype(jnp.float32)
                 for k, v in params_proj.items()}
    y_bf_ref = mlp_res_block_ref(x2_bf.astype(jnp.float32), params_bf, skipper=False)
    assert y_bf.dtype == jnp.bfloat16 and y_bf.shape == (B2, n_out)
    assert jnp.allclose(y_bf.astype(jnp.float32), y_bf_ref, atol=3e-2, rtol=3e-2)

    print("KERNEL_OK")
</pallas_src>

<mosaic_0001>
module attributes {stable_mosaic.version = 11 : i64} {
  func.func @_skip_kernel(%arg0: i32, %arg1: i32, %arg2: memref<16x32xf32, #tpu.memory_space<vmem>>, %arg3: memref<32x32xf32, #tpu.memory_space<vmem>>, %arg4: memref<1x32xf32, #tpu.memory_space<vmem>>, %arg5: memref<16x32xf32, #tpu.memory_space<vmem>>) attributes {dimension_semantics = [#tpu.dimension_semantics<parallel>, #tpu.dimension_semantics<parallel>], iteration_bounds = array<i64: 2, 1>, scalar_prefetch = 0 : i64, scratch_operands = 0 : i64, tpu.core_type = #tpu.core_type<tc>, window_params = [{transform_indices = @transform_0, window_bounds = array<i64: 16, 32>}, {transform_indices = @transform_1, window_bounds = array<i64: 32, 32>}, {transform_indices = @transform_2, window_bounds = array<i64: 1, 32>}, {transform_indices = @transform_3, window_bounds = array<i64: 16, 32>}]} {
    %c0 = arith.constant 0 : index
    %c0_0 = arith.constant 0 : index
    %0 = vector.load %arg2[%c0, %c0_0] : memref<16x32xf32, #tpu.memory_space<vmem>>, vector<16x32xf32>
    %c0_1 = arith.constant 0 : index
    %c0_2 = arith.constant 0 : index
    %1 = vector.load %arg3[%c0_1, %c0_2] : memref<32x32xf32, #tpu.memory_space<vmem>>, vector<32x32xf32>
    %cst = arith.constant dense<0.000000e+00> : vector<16x32xf32>
    %2 = tpu.matmul %0, %1, %cst {dimension_numbers = #tpu.dot_dimension_numbers<[1], [0], [0], [1], [0, 0, 1, 1], [], []>} : vector<16x32xf32>, vector<32x32xf32>, vector<16x32xf32> -> vector<16x32xf32>
    %c0_3 = arith.constant 0 : index
    %c0_4 = arith.constant 0 : index
    %3 = vector.load %arg4[%c0_3, %c0_4] : memref<1x32xf32, #tpu.memory_space<vmem>>, vector<1x32xf32>
    %4 = vector.broadcast %3 : vector<1x32xf32> to vector<16x32xf32>
    %5 = arith.addf %2, %4 : vector<16x32xf32>
    %6 = math.tanh %5 : vector<16x32xf32>
    %7 = arith.addf %0, %6 : vector<16x32xf32>
    %c0_5 = arith.constant 0 : index
    %c0_6 = arith.constant 0 : index
    %8 = vector.load %arg5[%c0_5, %c0_6] : memref<16x32xf32, #tpu.memory_space<vmem>>, vector<16x32xf32>
    tpu.vector_store %arg5[%c0_5, %c0_6], %7 {strides = array<i32>} : memref<16x32xf32, #tpu.memory_space<vmem>>, vector<16x32xf32>,
    return
  }
  func.func @transform_0(%arg0: i32, %arg1: i32) -> (i32, i32) {
    %c0_i32 = arith.constant 0 : i32
    %c0_i32_0 = arith.constant 0 : i32
    return %arg0, %c0_i32 : i32, i32
  }
  func.func @transform_1(%arg0: i32, %arg1: i32) -> (i32, i32) {
    %c0_i32 = arith.constant 0 : i32
    %c0_i32_0 = arith.constant 0 : i32
    return %c0_i32, %arg1 : i32, i32
  }
  func.func @transform_2(%arg0: i32, %arg1: i32) -> (i32, i32) {
    %c0_i32 = arith.constant 0 : i32
    %c0_i32_0 = arith.constant 0 : i32
    return %c0_i32, %arg1 : i32, i32
  }
  func.func @transform_3(%arg0: i32, %arg1: i32) -> (i32, i32) {
    %c0_i32 = arith.constant 0 : i32
    return %arg0, %arg1 : i32, i32
  }
}

</mosaic_0001>

<llo_original>
// kernel: _skip_call.1
$region0: #{_skip_call.1}
  #allocation0 [shape = 'u32[]', space=smem, size = 0x4, offset = 0x4, fixed_abs, tag = 'smem constant byte address 0x4 - core index']
  #allocation1 [shape = 'u32[72,128]{1,0:T(1,128)}', space=vmem, size = 0x9000, scoped, tag = 'internal scratch']
  %s0 = inlined_call_operand.hbm [shape: f32[32,32], index: 0, kind: input, shape index: {}]
  %s1 = inlined_call_operand.hbm [shape: f32[32,32], index: 1, kind: input, shape index: {}]
  %s2 = inlined_call_operand.vmem [shape: f32[1,32], index: 2, kind: input, shape index: {}]
  %s3 = inlined_call_operand.hbm [shape: f32[32,32], index: 3, kind: output, shape index: {}]
  %s4 = sld [smem:[#allocation0]]
  $region53: #{_skip_call.1} parent=0
    _
  %s6 = ssub.s32 1, %s4
  %s7 = scalar_select 0, %s6, %s4
  $region1: #{_skip_call.1} parent=0
    #allocation2 [shape = 'u8[16384]{0}', space=vmem, size = 0x4000, scoped, tag = 'input window, operand 0']
    #allocation3 [shape = 's32[2]{0}', space=sflag, size = 0x8, scoped, tag = 'scoped memory for _skip_call.1']
    #allocation4 [shape = 's32[2]{0}', space=sflag, size = 0x8, scoped, tag = 'scoped memory for _skip_call.1']
    #allocation5 [shape = 'u8[16384]{0}', space=vmem, size = 0x4000, scoped, tag = 'input window, operand 1, single buffered']
    #allocation6 [shape = 's32[1]{0}', space=sflag, size = 0x4, scoped, tag = 'scoped memory for _skip_call.1']
    #allocation7 [shape = 'u8[16384]{0}', space=vmem, size = 0x4000, scoped, tag = 'output window, operand 0']
    %8 = vsyncpa [#allocation3], 0
    %s9 = scalar_lea.sflag [#allocation3], 1
    %10 = vsyncpa %s9, 0
    %11 = vsyncpa [#allocation6], 0
    %12 = vsyncpa [#allocation4], 0
    %s13 = scalar_lea.sflag [#allocation4], 1
    %14 = vsyncpa %s13, 0
    loop: start=0, step=1, limit=4
    $region2: #{_skip_call.1} parent=1 // loop_pre_header
      _
    $region3: #{_skip_call.1} parent=1 // loop_header
      %s16 = sphi 0, %s20
      %p17 = scmp.ge.s32.totalorder %s16, 4
      %s23 = sphi 0, %s35
      %s24 = sphi 0, %s31
      %s25 = sphi 0, %s23
      %s26 = sphi 0, %s24
      %s27 = sphi 0, %s25
      %s28 = sphi 0, %s26
      %s38 = sphi 0, %s40
      %s41 = sphi 0, %s38
      %s42 = sphi 0, %s41
      %s58 = sphi 0, %s42
      %s64 = sphi 0, %s66
      %s67 = sphi 0, %s64
      %s68 = sphi 0, %s67
      %s84 = sphi 0, %s68
      %s90 = sphi 0, %s92
      %s93 = sphi 0, %s90
      %s94 = sphi 0, %s93
      %s110 = sphi 0, %s94
      %s118 = sphi 0, %s120
      %s121 = sphi 0, %s118
      %s122 = sphi 0, %s121
      %s138 = sphi 0, %s122
    $region4: #{_skip_call.1} parent=1 // loop_header_branch
      %19 = sbr.rel (%p17) target = $region8
    $region5: #{_skip_call.1} parent=1 // loop_body
      %s21 = ssub.s32 %s16, 1
      %s22 = ssub.s32 %s16, 2
      %s29 = sadd.s32 1, %s24
      %p30 = scmp.ge.s32.totalorder %s29, 1
      %s31 = scalar_select %p30, 0, %s29
      %s32 = sadd.s32 1, %s23
      %s33 = scalar_select %p30, %s32, %s23
      %p34 = scmp.ge.s32.totalorder %s33, 2
      %s35 = scalar_select %p34, 0, %s33
      %s36 = ssub.s32 %s23, %s35
      %p37 = scmp.eq.s32.totalorder %s36, 0
      %s39 = sadd.s32 %s38, 1
      %s40 = scalar_select %p37, %s38, %s39
      %p43 = pneg %p37
      %p44 = scmp.eq.s32.totalorder %s16, 1
      %p45 = por %p43, %p44
      %p46 = scmp.ne.s32.totalorder %s38, %s41
      %p47 = scmp.eq.s32.totalorder %s16, 0
      %p48 = por %p46, %p47
      %p49 = scmp.ne.s32.totalorder %s38, %s41
      %p50 = scmp.eq.s32.totalorder %s21, 1
      %p51 = por %p49, %p50
      %p52 = scmp.ne.s32.totalorder %s41, %s42
      %p53 = scmp.eq.s32.totalorder %s21, 0
      %p54 = por %p52, %p53
      %p55 = scmp.ne.s32.totalorder %s41, %s42
      %p56 = scmp.eq.s32.totalorder %s22, 1
      %p57 = por %p55, %p56
      %p59 = scmp.ne.s32.totalorder %s42, %s58
      %p60 = scmp.eq.s32.totalorder %s22, 0
      %p61 = por %p59, %p60
      %s62 = ssub.s32 %s24, %s31
      %p63 = scmp.eq.s32.totalorder %s62, 0
      %s65 = sadd.s32 %s64, 1
      %s66 = scalar_select %p63, %s64, %s65
      %p69 = pneg %p63
      %p70 = scmp.eq.s32.totalorder %s16, 1
      %p71 = por %p69, %p70
      %p72 = scmp.ne.s32.totalorder %s64, %s67
      %p73 = scmp.eq.s32.totalorder %s16, 0
      %p74 = por %p72, %p73
      %p75 = scmp.ne.s32.totalorder %s64, %s67
      %p76 = scmp.eq.s32.totalorder %s21, 1
      %p77 = por %p75, %p76
      %p78 = scmp.ne.s32.totalorder %s67, %s68
      %p79 = scmp.eq.s32.totalorder %s21, 0
      %p80 = por %p78, %p79
      %p81 = scmp.ne.s32.totalorder %s67, %s68
      %p82 = scmp.eq.s32.totalorder %s22, 1
      %p83 = por %p81, %p82
      %p85 = scmp.ne.s32.totalorder %s68, %s84
      %p86 = scmp.eq.s32.totalorder %s22, 0
      %p87 = por %p85, %p86
      %s88 = ssub.s32 %s24, %s31
      %p89 = scmp.eq.s32.totalorder %s88, 0
      %s91 = sadd.s32 %s90, 1
      %s92 = scalar_select %p89, %s90, %s91
      %p95 = pneg %p89
      %p96 = scmp.eq.s32.totalorder %s16, 1
      %p97 = por %p95, %p96
      %p98 = scmp.ne.s32.totalorder %s90, %s93
      %p99 = scmp.eq.s32.totalorder %s16, 0
      %p100 = por %p98, %p99
      %p101 = scmp.ne.s32.totalorder %s90, %s93
      %p102 = scmp.eq.s32.totalorder %s21, 1
      %p103 = por %p101, %p102
      %p104 = scmp.ne.s32.totalorder %s93, %s94
      %p105 = scmp.eq.s32.totalorder %s21, 0
      %p106 = por %p104, %p105
      %p107 = scmp.ne.s32.totalorder %s93, %s94
      %p108 = scmp.eq.s32.totalorder %s22, 1
      %p109 = por %p107, %p108
      %p111 = scmp.ne.s32.totalorder %s94, %s110
      %p112 = scmp.eq.s32.totalorder %s22, 0
      %p113 = por %p111, %p112
      %s114 = ssub.s32 %s23, %s35
      %s115 = ssub.s32 %s24, %s31
      %s116 = sor.u32 %s114, %s115
      %p117 = scmp.eq.s32.totalorder %s116, 0
      %s119 = sadd.s32 %s118, 1
      %s120 = scalar_select %p117, %s118, %s119
      %p123 = pneg %p117
      %p124 = scmp.eq.s32.totalorder %s16, 1
      %p125 = por %p123, %p124
      %p126 = scmp.ne.s32.totalorder %s118, %s121
      %p127 = scmp.eq.s32.totalorder %s16, 0
      %p128 = por %p126, %p127
      %p129 = scmp.ne.s32.totalorder %s118, %s121
      %p130 = scmp.eq.s32.totalorder %s21, 1
      %p131 = por %p129, %p130
      %p132 = scmp.ne.s32.totalorder %s121, %s122
      %p133 = scmp.eq.s32.totalorder %s21, 0
      %p134 = por %p132, %p133
      %p135 = scmp.ne.s32.totalorder %s121, %s122
      %p136 = scmp.eq.s32.totalorder %s22, 1
      %p137 = por %p135, %p136
      %p139 = scmp.ne.s32.totalorder %s122, %s138
      %p140 = scmp.eq.s32.totalorder %s22, 0
      %p141 = por %p139, %p140
      %p142 = scmp.le.s32.totalorder 1, %s16
      %p143 = scmp.lt.s32.totalorder %s16, 3
      %p144 = pnand %p142, %p143
      %p145 = pneg %p144
      // Predicated region
      $region9: #{_skip_call.1} parent=5 // pred_check
        _
      $region10: #{_skip_call.1} parent=5 // pred_check_branch
        %147 = sbr.rel (%p144) target = $region12
      $region11: #{_skip_call.1} parent=5 // pred_region
        %s148 = ssub.s32 %s16, 1
        // Predicated region
        $region13: #{_skip_call.1} parent=11 // pred_check
          %p149 = pneg %p80
        $region14: #{_skip_call.1} parent=11 // pred_check_branch
          %151 = sbr.rel (%p149) target = $region16
        $region15: #{_skip_call.1} parent=11 // pred_region
          %153 = vsyncadd [#allocation6], 0
          %s154 = smul.addr %s26, 8
          %s155 = scalar_lea.hbm %s1, %s154
          %s156 = sshll.u32 %s155, 4
          %s157 = int_to_ptr.hbm [resolvable:$true] %s156
          %s158 = sshll.u32 [#allocation5], 4
          %s159 = int_to_ptr.vmem [resolvable:$true] %s158
          %164 = dma.hbm_to_vmem [thread:$0]  %s157, 512, %s159, [#allocation6], 128, 128, 8
        $region16: #{_skip_call.1} parent=11 // pred_fallthru
          _
        // Predicated region
        $region17: #{_skip_call.1} parent=11 // pred_check
          %p165 = pneg %p106
        $region18: #{_skip_call.1} parent=11 // pred_check_branch
          %167 = sbr.rel (%p165) target = $region20
        $region19: #{_skip_call.1} parent=11 // pred_region
          %p168 = scmp.lt.s32.totalorder %s26, 0
          %s169 = scalar_select %p168, %s26, 0
          %s170 = scalar_lea.vmem %s2, %s169
        $region20: #{_skip_call.1} parent=11 // pred_fallthru
          _
      $region12: #{_skip_call.1} parent=5 // pred_fallthru
        _
      %p171 = scmp.lt.s32.totalorder %s16, 2
      // Predicated region
      $region21: #{_skip_call.1} parent=5 // pred_check
        %p172 = pneg %p171
      $region22: #{_skip_call.1} parent=5 // pred_check_branch
        %174 = sbr.rel (%p172) target = $region24
      $region23: #{_skip_call.1} parent=5 // pred_region
        // Predicated region
        $region25: #{_skip_call.1} parent=23 // pred_check
          %p175 = pneg %p48
        $region26: #{_skip_call.1} parent=23 // pred_check_branch
          %177 = sbr.rel (%p175) target = $region28
        $region27: #{_skip_call.1} parent=23 // pred_region
          %s178 = sand.u32 %s38, 1
          %s179 = scalar_lea.sflag [#allocation3], %s178
          %s180 = sand.u32 %s38, 1
          %s181 = smul.addr %s180, 16
          %s182 = scalar_lea.vmem [#allocation2], %s181
          %s183 = smul.u32 2, %s23
          %185 = vsyncadd %s179, 0
          %s186 = smul.addr %s183, 8
          %s187 = scalar_lea.hbm %s0, %s186
          %s188 = sshll.u32 %s187, 4
          %s189 = int_to_ptr.hbm [resolvable:$true] %s188
          %s190 = sshll.u32 %s182, 4
          %s191 = int_to_ptr.vmem [resolvable:$true] %s190
          %196 = dma.hbm_to_vmem [thread:$0]  %s189, 256, %s191, %s179, 128, 128, 8
        $region28: #{_skip_call.1} parent=23 // pred_fallthru
          _
      $region24: #{_skip_call.1} parent=5 // pred_fallthru
        _
      %p197 = scmp.le.s32.totalorder 1, %s16
      %p198 = scmp.lt.s32.totalorder %s16, 3
      %p199 = pnand %p197, %p198
      %p200 = pneg %p199
      // Predicated region
      $region29: #{_skip_call.1} parent=5 // pred_check
        _
      $region30: #{_skip_call.1} parent=5 // pred_check_branch
        %202 = sbr.rel (%p199) target = $region32
      $region31: #{_skip_call.1} parent=5 // pred_region
        %s203 = ssub.s32 %s16, 1
        %s204 = sand.u32 %s41, 1
        %s205 = scalar_lea.sflag [#allocation3], %s204
        %s206 = sand.u32 %s41, 1
        %s207 = smul.addr %s206, 16
        %s208 = scalar_lea.vmem [#allocation2], %s207
        // Predicated region
        $region33: #{_skip_call.1} parent=31 // pred_check
          %p209 = pneg %p54
        $region34: #{_skip_call.1} parent=31 // pred_check_branch
          %211 = sbr.rel (%p209) target = $region36
        $region35: #{_skip_call.1} parent=31 // pred_region
          %213 = dma.done %s205, 256
        $region36: #{_skip_call.1} parent=31 // pred_fallthru
          _
        // Predicated region
        $region37: #{_skip_call.1} parent=31 // pred_check
          %p214 = pneg %p80
        $region38: #{_skip_call.1} parent=31 // pred_check_branch
          %216 = sbr.rel (%p214) target = $region40
        $region39: #{_skip_call.1} parent=31 // pred_region
          %218 = dma.done [#allocation6], 512
        $region40: #{_skip_call.1} parent=31 // pred_fallthru
          _
        %s219 = sand.u32 %s41, 1
        %s220 = scalar_lea.sflag [#allocation3], %s219
        %s221 = sand.u32 %s41, 1
        %s222 = smul.addr %s221, 16
        %s223 = scalar_lea.vmem [#allocation2], %s222
        %p224 = pneg %p54
        %p225 = pneg %p51
        %p226 = pneg %p80
        %p227 = pneg %p77
        %p228 = scmp.lt.s32.totalorder %s26, 0
        %s229 = scalar_select %p228, %s26, 0
        %s230 = scalar_lea.vmem %s2, %s229
        %p231 = pneg %p106
        %p232 = pneg %p103
        %p233 = pneg %p134
        %p234 = pneg %p131
        %s235 = sand.u32 %s121, 1
        %s236 = scalar_lea.sflag [#allocation4], %s235
        %s237 = sand.u32 %s121, 1
        %s238 = smul.addr %s237, 16
        %s239 = scalar_lea.vmem [#allocation7], %s238
        %s240 = smul.u32 2, %s25
        %p241 = scmp.lt.s32.totalorder %s26, 0
        %s242 = scalar_select %p241, %s26, 0
        %s243 = scalar_lea.vmem %s2, %s242
        %s244 = smul.u32 2, %s25
        %v245 = vld [vmem:[%s208] sm:$0xff]
        %v246 = vld [vmem:[%s208 + $0x8] sm:$0xff]
        %v247 = vld [vmem:[#allocation5] sm:$0xff]
        %v248 = vld [vmem:[#allocation5 + $0x8] sm:$0xff]
        %v249 = vld [vmem:[#allocation5 + $0x10] sm:$0xff]
        %v250 = vld [vmem:[#allocation5 + $0x18] sm:$0xff]
        %v251 = vld [vmem:[%s243] sm:$0x1]
        %v253 = vperm.slane %v251, 0
        %vm255 = vcmask 261120
        %v257 = vsel %vm255, %v245, 0
        %v260 = vsel %vm255, %v246, 0
        %262 = vmatpush.msra.mxu0 0.0
        %263 = vmatpush.msra.mxu0 0.0
        %264 = vmatpush.msra.mxu0 0.0
        %265 = vmatpush.msra.mxu0 0.0
        %266 = vmatpush.msra.mxu0 0.0
        %267 = vmatpush.msra.mxu0 0.0
        %268 = vmatpush.msra.mxu0 0.0
        %269 = vmatpush.msra.mxu0 0.0
        %270 = vmatpush.msra.mxu0 0.0
        %271 = vmatpush.msra.mxu0 0.0
        %272 = vmatpush.msra.mxu0 0.0
        %273 = vmatpush.msra.mxu0 0.0
        %274 = vmatpush.msra.mxu0 %v250
        %275 = vmatpush.msra.mxu0 %v249
        %276 = vmatpush.msra.mxu0 %v248
        %277 = vmatpush.msra.mxu0 %v247
        %278 = vmatmul.f32.gmra.mxu0 %v257
        %v279 = vpop.f32.mrf.mxu0
        %v280 = vadd.f32 %v253, %v279
        %281 = vmatmul.f32.gmra.mxu0 %v260
        %v282 = vpop.f32.mrf.mxu0
        %v283 = vadd.f32 %v253, %v282
        %284 = vdwg.mxu0
        %v285 = vtanh.pop %v280
        %v286 = vtanh.pop %v283
        %v287 = vadd.f32 %v245, %v285
        %v288 = vadd.f32 %v246, %v286
        %289 = vst.msk [vmem:[%s239] sm:$0xff] %vm255, %v287
        %290 = vst.msk [vmem:[%s239 + $0x8] sm:$0xff] %vm255, %v288
        %s291 = sand.u32 %s121, 1
        %s292 = scalar_lea.sflag [#allocation4], %s291
        %s293 = sand.u32 %s121, 1
        %s294 = smul.addr %s293, 16
        %s295 = scalar_lea.vmem [#allocation7], %s294
        // Predicated region
        $region41: #{_skip_call.1} parent=31 // pred_check
          %p296 = pneg %p131
        $region42: #{_skip_call.1} parent=31 // pred_check_branch
          %298 = sbr.rel (%p296) target = $region44
        $region43: #{_skip_call.1} parent=31 // pred_region
          %s299 = smul.u32 2, %s25
          %301 = vsyncadd %s292, 0
          %s302 = sadd.s32 %s26, %s299
          %s303 = smul.addr %s302, 8
          %s304 = scalar_lea.hbm %s3, %s303
          %s305 = sshll.u32 %s295, 4
          %s306 = int_to_ptr.vmem [resolvable:$true] %s305
          %s307 = sshll.u32 %s304, 4
          %s308 = int_to_ptr.hbm [resolvable:$true] %s307
          %313 = dma.vmem_to_hbm [thread:$0]  %s306, 256, %s308, %s292, 128, 128, 8
        $region44: #{_skip_call.1} parent=31 // pred_fallthru
          _
      $region32: #{_skip_call.1} parent=5 // pred_fallthru
        _
      %p314 = scmp.le.s32.totalorder 2, %s16
      // Predicated region
      $region45: #{_skip_call.1} parent=5 // pred_check
        %p315 = pneg %p314
      $region46: #{_skip_call.1} parent=5 // pred_check_branch
        %317 = sbr.rel (%p315) target = $region48
      $region47: #{_skip_call.1} parent=5 // pred_region
        %s318 = ssub.s32 %s16, 2
        // Predicated region
        $region49: #{_skip_call.1} parent=47 // pred_check
          %p319 = pneg %p137
        $region50: #{_skip_call.1} parent=47 // pred_check_branch
          %321 = sbr.rel (%p319) target = $region52
        $region51: #{_skip_call.1} parent=47 // pred_region
          %s322 = sand.u32 %s122, 1
          %s323 = scalar_lea.sflag [#allocation4], %s322
          %s324 = sand.u32 %s122, 1
          %s325 = smul.addr %s324, 16
          %s326 = scalar_lea.vmem [#allocation7], %s325
          %328 = dma.done %s323, 256
        $region52: #{_skip_call.1} parent=47 // pred_fallthru
          _
      $region48: #{_skip_call.1} parent=5 // pred_fallthru
        _
    $region6: #{_skip_call.1} parent=1 // loop_footer
      %s20 = sadd.s32 1, %s16
    $region7: #{_skip_call.1} parent=1 // loop_footer_branch
      %15 = sbr.rel target = $region3
    $region8: #{_skip_call.1} parent=1 // loop_exit
      _
    %329 = vsyncpa [#allocation3], 1
    %s330 = scalar_lea.sflag [#allocation3], 1
    %331 = vsyncpa %s330, 1
    %332 = vsyncpa [#allocation6], 1
    %333 = vsyncpa [#allocation4], 1
    %s334 = scalar_lea.sflag [#allocation4], 1
    %335 = vsyncpa %s334, 1

</llo_original>
